<compile_context>
chip_gen: v6e
topology: v6e:2x2x1
jax: 0.10.0
libtpu: 0.0.40
codegen_flags: <defaults>
</compile_context>

<pallas_src>
import jax
import jax.numpy as jnp
from jax.experimental import pallas as pl
from jax.experimental.pallas import tpu as pltpu


def _round_up(x: int, m: int) -> int:
    return (x + m - 1) // m * m


def _cdiv(a: int, b: int) -> int:
    return (a + b - 1) // b


def _patch_proj_kernel(x_ref, w_ref, b_ref, o_ref):
    # x_ref: (tm, K_pad) bf16, w_ref: (K_pad, tn) bf16 (resident when grid_n==1),
    # b_ref: (1, tn) f32, o_ref: (tm, tn) out_dtype.
    acc = jnp.dot(x_ref[...], w_ref[...], preferred_element_type=jnp.float32)
    o_ref[...] = (acc + b_ref[...]).astype(o_ref.dtype)


def patch_embed_forward(x, weight, bias, patch_size, stride, *,
                        compute_dtype=jnp.bfloat16, out_dtype=None, tm_max=1024):
    """x: (B, C, H, W) NCHW; weight: (D, C, ph, pw); bias: (D,).

    Returns (B, num_patches, D) — same as PyTorch PatchEmbed with flatten=True
    and norm_layer=None.
    """
    B, C, H, W = x.shape
    D = weight.shape[0]
    ph, pw = patch_size
    assert stride == ph and stride == pw, "kernel assumes non-overlapping patches"
    assert H % ph == 0 and W % pw == 0, (
        f"H={H}, W={W} must be divisible by patch_size={patch_size}")
    gh, gw = H // ph, W // pw
    K = C * ph * pw
    M = B * gh * gw
    out_dtype = x.dtype if out_dtype is None else out_dtype

    cd_bytes = jnp.dtype(compute_dtype).itemsize
    out_bytes = jnp.dtype(out_dtype).itemsize

    # ---- Host-side glue: extract non-overlapping patches in PyTorch conv
    # flatten order (c, kh, kw).  Transpose + pad + bf16 cast fuse into a
    # single XLA pass (read NCHW f32 once, write bf16 patches once).
    # TODO(synk): fuse patch extraction into the kernel (BlockSpec over raw
    # NCHW (b, gh) bands + in-kernel shuffle with a pre-permuted weight) to
    # remove this extra HBM activation pass entirely.
    patches = x.reshape(B, C, gh, ph, gw, pw)
    patches = jnp.transpose(patches, (0, 2, 4, 1, 3, 5)).reshape(M, K)

    # Weight: (D, C, ph, pw) -> (K, D); bias kept in f32 for the in-kernel add.
    w_mat = weight.reshape(D, K).T
    b_row = bias.reshape(1, D).astype(jnp.float32)

    # ---- Tiling: lane-dense 128-multiples on K and D (D padding decoupled
    # from tn), tm a multiple of 16 (bf16 sublane packing).
    K_pad = _round_up(K, 128)
    D_pad = _round_up(D, 128)

    # Keep the full weight resident in VMEM whenever it fits comfortably
    # (grid_n == 1 -> constant index_map -> weight/bias DMA'd exactly once).
    if K_pad * D_pad * cd_bytes <= 8 * 1024 * 1024:
        grid_n, tn = 1, D_pad
    else:  # fallback for very large embed dims: balanced D tiles
        grid_n = _cdiv(D_pad, 512)
        tn = _round_up(_cdiv(D_pad, grid_n), 128)
        D_pad = grid_n * tn

    # M tiling: large tiles for long uninterrupted MXU runs, but sized from the
    # actual M (ceil-split) so padding waste stays small for small batches.
    # Round grid_m up to an even count (when > 1) for a clean 50/50 megacore
    # split on v7x.
    grid_m = _cdiv(M, tm_max)
    if grid_m > 1 and grid_m % 2 == 1:
        grid_m += 1
    tm = _round_up(_cdiv(M, grid_m), 16)
    M_pad = grid_m * tm

    patches = jnp.pad(patches, ((0, M_pad - M), (0, K_pad - K))).astype(compute_dtype)
    w_mat = jnp.pad(w_mat, ((0, K_pad - K), (0, D_pad - D))).astype(compute_dtype)
    b_row = jnp.pad(b_row, ((0, 0), (0, D_pad - D)))

    # VMEM budget (conservatively assume double-buffering on every operand);
    # request headroom but cap at 48 MiB so it also fits v7x (64 MiB physical).
    vmem_need = (2 * tm * K_pad * cd_bytes        # patches tiles
                 + 2 * K_pad * tn * cd_bytes      # weight tile(s)
                 + 2 * tn * 4                     # bias
                 + 2 * tm * tn * out_bytes)       # output tiles
    vmem_limit = min(max(int(vmem_need * 3 // 2), 32 * 1024 * 1024),
                     48 * 1024 * 1024)

    cost = pl.CostEstimate(
        flops=2 * M_pad * K_pad * D_pad,
        transcendentals=0,
        bytes_accessed=(M_pad * K_pad * cd_bytes                       # patches once
                        + (K_pad * D_pad * cd_bytes if grid_n == 1     # weight once
                           else grid_m * K_pad * D_pad * cd_bytes)     # (or per m-tile)
                        + D_pad * 4                                    # bias
                        + M_pad * D_pad * out_bytes),                  # output once
    )

    out = pl.pallas_call(
        _patch_proj_kernel,
        out_shape=jax.ShapeDtypeStruct((M_pad, D_pad), out_dtype),
        grid_spec=pltpu.PrefetchScalarGridSpec(
            num_scalar_prefetch=0,
            # n innermost: patches tile stays resident across the (usually
            # trivial) n loop; with grid_n == 1 weight/bias are fetched once.
            grid=(grid_m, grid_n),
            in_specs=[
                pl.BlockSpec((tm, K_pad), lambda i, j: (i, 0)),
                pl.BlockSpec((K_pad, tn), lambda i, j: (0, j)),
                pl.BlockSpec((1, tn), lambda i, j: (0, j)),
            ],
            out_specs=pl.BlockSpec((tm, tn), lambda i, j: (i, j)),
        ),
        compiler_params=pltpu.CompilerParams(
            dimension_semantics=("parallel", "parallel"),
            vmem_limit_bytes=vmem_limit,
        ),
        cost_estimate=cost,
    )(patches, w_mat, b_row)

    # Strip padding, then (M, D) -> (B, num_patches, D).
    return out[:M, :D].reshape(B, gh * gw, D)


if __name__ == "__main__":
    # Small PatchEmbed config: img_size=16, patch_size=4, stride=4,
    # in_chans=4, embed_dim=32  =>  num_patches = 16 per image.
    B, C, H, W = 2, 4, 16, 16
    ph = pw = 4
    stride = 4
    embed_dim = 32

    key = jax.random.PRNGKey(0)
    kx, kw, kb = jax.random.split(key, 3)
    x = jax.random.normal(kx, (B, C, H, W), dtype=jnp.float32)
    weight = jax.random.normal(kw, (embed_dim, C, ph, pw), dtype=jnp.float32) * 0.02
    bias = jax.random.normal(kb, (embed_dim,), dtype=jnp.float32) * 0.02

    out = patch_embed_forward(x, weight, bias, (ph, pw), stride)
    out = jax.block_until_ready(out)
    assert out.shape == (B, (H // stride) * (W // stride), embed_dim), out.shape

    # Reference 1: conv with the same bf16 compute dtype (f32 accumulation) so
    # the tolerance only reflects accumulation-order differences.
    ref = jax.lax.conv_general_dilated(
        x.astype(jnp.bfloat16), weight.astype(jnp.bfloat16),
        window_strides=(stride, stride), padding="VALID",
        dimension_numbers=("NCHW", "OIHW", "NCHW"),
        preferred_element_type=jnp.float32)
    ref = ref + bias.reshape(1, embed_dim, 1, 1)
    ref = ref.reshape(B, embed_dim, -1).transpose(0, 2, 1).astype(x.dtype)
    assert jnp.allclose(out, ref, atol=1e-2, rtol=1e-2), \
        float(jnp.max(jnp.abs(out - ref)))

    # Reference 2: full-f32 conv, tolerance sized for bf16 input rounding.
    ref32 = jax.lax.conv_general_dilated(
        x, weight, window_strides=(stride, stride), padding="VALID",
        dimension_numbers=("NCHW", "OIHW", "NCHW"))
    ref32 = ref32 + bias.reshape(1, embed_dim, 1, 1)
    ref32 = ref32.reshape(B, embed_dim, -1).transpose(0, 2, 1)
    assert jnp.allclose(out, ref32, atol=5e-2, rtol=5e-2), \
        float(jnp.max(jnp.abs(out - ref32)))

    print("KERNEL_OK")
</pallas_src>

<mosaic_0001>
module attributes {stable_mosaic.version = 11 : i64} {
  func.func @_patch_proj_kernel(%arg0: i32, %arg1: i32, %arg2: memref<32x128xbf16, #tpu.memory_space<vmem>>, %arg3: memref<128x128xbf16, #tpu.memory_space<vmem>>, %arg4: memref<1x128xf32, #tpu.memory_space<vmem>>, %arg5: memref<32x128xf32, #tpu.memory_space<vmem>>) attributes {dimension_semantics = [#tpu.dimension_semantics<parallel>, #tpu.dimension_semantics<parallel>], iteration_bounds = array<i64: 1, 1>, scalar_prefetch = 0 : i64, scratch_operands = 0 : i64, tpu.core_type = #tpu.core_type<tc>, window_params = [{transform_indices = @transform_0, window_bounds = array<i64: 32, 128>}, {transform_indices = @transform_1, window_bounds = array<i64: 128, 128>}, {transform_indices = @transform_2, window_bounds = array<i64: 1, 128>}, {transform_indices = @transform_3, window_bounds = array<i64: 32, 128>}]} {
    %c0 = arith.constant 0 : index
    %c0_0 = arith.constant 0 : index
    %0 = vector.load %arg2[%c0, %c0_0] : memref<32x128xbf16, #tpu.memory_space<vmem>>, vector<32x128xbf16>
    %c0_1 = arith.constant 0 : index
    %c0_2 = arith.constant 0 : index
    %1 = vector.load %arg3[%c0_1, %c0_2] : memref<128x128xbf16, #tpu.memory_space<vmem>>, vector<128x128xbf16>
    %cst = arith.constant dense<0.000000e+00> : vector<32x128xf32>
    %2 = tpu.matmul %0, %1, %cst {dimension_numbers = #tpu.dot_dimension_numbers<[1], [0], [0], [1], [0, 0, 1, 1], [], []>} : vector<32x128xbf16>, vector<128x128xbf16>, vector<32x128xf32> -> vector<32x128xf32>
    %c0_3 = arith.constant 0 : index
    %c0_4 = arith.constant 0 : index
    %3 = vector.load %arg4[%c0_3, %c0_4] : memref<1x128xf32, #tpu.memory_space<vmem>>, vector<1x128xf32>
    %4 = vector.broadcast %3 : vector<1x128xf32> to vector<32x128xf32>
    %5 = arith.addf %2, %4 : vector<32x128xf32>
    %c0_5 = arith.constant 0 : index
    %c0_6 = arith.constant 0 : index
    %6 = vector.load %arg5[%c0_5, %c0_6] : memref<32x128xf32, #tpu.memory_space<vmem>>, vector<32x128xf32>
    tpu.vector_store %arg5[%c0_5, %c0_6], %5 {strides = array<i32>} : memref<32x128xf32, #tpu.memory_space<vmem>>, vector<32x128xf32>,
    return
  }
  func.func @transform_0(%arg0: i32, %arg1: i32) -> (i32, i32) {
    %c0_i32 = arith.constant 0 : i32
    %c0_i32_0 = arith.constant 0 : i32
    return %arg0, %c0_i32 : i32, i32
  }
  func.func @transform_1(%arg0: i32, %arg1: i32) -> (i32, i32) {
    %c0_i32 = arith.constant 0 : i32
    %c0_i32_0 = arith.constant 0 : i32
    return %c0_i32, %arg1 : i32, i32
  }
  func.func @transform_2(%arg0: i32, %arg1: i32) -> (i32, i32) {
    %c0_i32 = arith.constant 0 : i32
    %c0_i32_0 = arith.constant 0 : i32
    return %c0_i32, %arg1 : i32, i32
  }
  func.func @transform_3(%arg0: i32, %arg1: i32) -> (i32, i32) {
    %c0_i32 = arith.constant 0 : i32
    return %arg0, %arg1 : i32, i32
  }
}

</mosaic_0001>

<llo_original>
// kernel: tpu_custom_call.1
$region0: #{tpu_custom_call.1}
  #allocation0 [shape = 'u32[]', space=smem, size = 0x4, offset = 0x4, fixed_abs, tag = 'smem constant byte address 0x4 - core index']
  #allocation1 [shape = 'u32[144,128]{1,0:T(1,128)}', space=vmem, size = 0x12000, scoped, tag = 'internal scratch']
  %s0 = inlined_call_operand.hbm [shape: bf16[32,128], index: 0, kind: input, shape index: {}]
  %s1 = inlined_call_operand.hbm [shape: bf16[128,128], index: 1, kind: input, shape index: {}]
  %s2 = inlined_call_operand.vmem [shape: f32[1,128], index: 2, kind: input, shape index: {}]
  %s3 = inlined_call_operand.hbm [shape: f32[32,128], index: 3, kind: output, shape index: {}]
  %s4 = sld [smem:[#allocation0]]
  $region30: #{tpu_custom_call.1} parent=0
    _
  %s6 = ssub.s32 1, %s4
  %s7 = scalar_select 0, %s6, %s4
  $region1: #{tpu_custom_call.1} parent=0
    #allocation2 [shape = 'u8[8192]{0}', space=vmem, size = 0x2000, scoped, tag = 'input window, operand 0, single buffered']
    #allocation3 [shape = 's32[1]{0}', space=sflag, size = 0x4, scoped, tag = 'scoped memory for tpu_custom_call.1']
    #allocation4 [shape = 's32[1]{0}', space=sflag, size = 0x4, scoped, tag = 'scoped memory for tpu_custom_call.1']
    #allocation5 [shape = 'u8[32768]{0}', space=vmem, size = 0x8000, scoped, tag = 'input window, operand 1, single buffered']
    #allocation6 [shape = 's32[1]{0}', space=sflag, size = 0x4, scoped, tag = 'scoped memory for tpu_custom_call.1']
    #allocation7 [shape = 'u8[16384]{0}', space=vmem, size = 0x4000, scoped, tag = 'output window, operand 0, single buffered']
    %8 = vsyncpa [#allocation3], 0
    %9 = vsyncpa [#allocation6], 0
    %10 = vsyncpa [#allocation4], 0
    // Predicated region
    $region2: #{tpu_custom_call.1} parent=1 // pred_check
      _
    $region3: #{tpu_custom_call.1} parent=1 // pred_check_branch
      %12 = sbr.rel (0) target = $region5
    $region4: #{tpu_custom_call.1} parent=1 // pred_region
      %s14 = ssub.s32 256, 256
      %15 = vsyncadd [#allocation3], %s14
      %s16 = sshll.u32 [#allocation2], 4
      %s17 = int_to_ptr.vmem [resolvable:$true] %s16
      %22 = dma.hbm_to_vmem [thread:$0]  %s0, 256, %s17, [#allocation3], 64, 64, 4
    $region5: #{tpu_custom_call.1} parent=1 // pred_fallthru
      _
    // Predicated region
    $region6: #{tpu_custom_call.1} parent=1 // pred_check
      _
    $region7: #{tpu_custom_call.1} parent=1 // pred_check_branch
      %24 = sbr.rel (0) target = $region9
    $region8: #{tpu_custom_call.1} parent=1 // pred_region
      %s26 = ssub.s32 1024, 1024
      %27 = vsyncadd [#allocation6], %s26
      %s28 = sshll.u32 [#allocation5], 4
      %s29 = int_to_ptr.vmem [resolvable:$true] %s28
      %34 = dma.hbm_to_vmem [thread:$0]  %s1, 1024, %s29, [#allocation6], 64, 64, 4
    $region9: #{tpu_custom_call.1} parent=1 // pred_fallthru
      _
    // Predicated region
    $region10: #{tpu_custom_call.1} parent=1 // pred_check
      _
    $region11: #{tpu_custom_call.1} parent=1 // pred_check_branch
      %36 = sbr.rel (0) target = $region13
    $region12: #{tpu_custom_call.1} parent=1 // pred_region
      _
    $region13: #{tpu_custom_call.1} parent=1 // pred_fallthru
      _
    // Predicated region
    $region14: #{tpu_custom_call.1} parent=1 // pred_check
      _
    $region15: #{tpu_custom_call.1} parent=1 // pred_check_branch
      %38 = sbr.rel (0) target = $region17
    $region16: #{tpu_custom_call.1} parent=1 // pred_region
      %39 = dma.done [#allocation3], 256
    $region17: #{tpu_custom_call.1} parent=1 // pred_fallthru
      _
    // Predicated region
    $region18: #{tpu_custom_call.1} parent=1 // pred_check
      _
    $region19: #{tpu_custom_call.1} parent=1 // pred_check_branch
      %41 = sbr.rel (0) target = $region21
    $region20: #{tpu_custom_call.1} parent=1 // pred_region
      %42 = dma.done [#allocation6], 1024
    $region21: #{tpu_custom_call.1} parent=1 // pred_fallthru
      _
    %v44 = vld [vmem:[#allocation2] sm:$0xf]
    %v45 = vld [vmem:[#allocation2 + $0x4] sm:$0xf]
    %v46 = vld [vmem:[#allocation2 + $0x8] sm:$0xf]
    %v47 = vld [vmem:[#allocation2 + $0xc] sm:$0xf]
    %v48 = vld [vmem:[#allocation5] sm:$0xf]
    %v49 = vld [vmem:[#allocation5 + $0x4] sm:$0xf]
    %v50 = vld [vmem:[#allocation5 + $0x8] sm:$0xf]
    %v51 = vld [vmem:[#allocation5 + $0xc] sm:$0xf]
    %v52 = vld [vmem:[#allocation5 + $0x10] sm:$0xf]
    %v53 = vld [vmem:[#allocation5 + $0x14] sm:$0xf]
    %v54 = vld [vmem:[#allocation5 + $0x18] sm:$0xf]
    %v55 = vld [vmem:[#allocation5 + $0x1c] sm:$0xf]
    %v56 = vld [vmem:[#allocation5 + $0x20] sm:$0xf]
    %v57 = vld [vmem:[#allocation5 + $0x24] sm:$0xf]
    %v58 = vld [vmem:[#allocation5 + $0x28] sm:$0xf]
    %v59 = vld [vmem:[#allocation5 + $0x2c] sm:$0xf]
    %v60 = vld [vmem:[#allocation5 + $0x30] sm:$0xf]
    %v61 = vld [vmem:[#allocation5 + $0x34] sm:$0xf]
    %v62 = vld [vmem:[#allocation5 + $0x38] sm:$0xf]
    %v63 = vld [vmem:[#allocation5 + $0x3c] sm:$0xf]
    %v64 = vld [vmem:[%s2] sm:$0x1]
    %v66 = vlaneseq
    %v67 = vshrl.u32 %v66, 7
    %v68 = vsub.s32 0, %v67
    %v69 = vrot.slane %v64, %v68
    %v75 = vunpack.c.l.b16 %v44
    %v76 = vunpack.c.l.b16 %v45
    %v77 = vunpack.c.l.b16 %v46
    %v78 = vunpack.c.l.b16 %v47
    %v79 = vpack.c.b16 %v76, %v75
    %v80 = vpack.c.b16 %v78, %v77
    %v99 = vunpack.c.l.b16 %v48
    %v100 = vunpack.c.l.b16 %v49
    %v101 = vunpack.c.l.b16 %v50
    %v102 = vunpack.c.l.b16 %v51
    %v103 = vunpack.c.l.b16 %v52
    %v104 = vunpack.c.l.b16 %v53
    %v105 = vunpack.c.l.b16 %v54
    %v106 = vunpack.c.l.b16 %v55
    %v107 = vunpack.c.l.b16 %v56
    %v108 = vunpack.c.l.b16 %v57
    %v109 = vunpack.c.l.b16 %v58
    %v110 = vunpack.c.l.b16 %v59
    %v111 = vunpack.c.l.b16 %v60
    %v112 = vunpack.c.l.b16 %v61
    %v113 = vunpack.c.l.b16 %v62
    %v114 = vunpack.c.l.b16 %v63
    %v115 = vpack.c.b16 %v100, %v99
    %v116 = vpack.c.b16 %v102, %v101
    %v117 = vpack.c.b16 %v104, %v103
    %v118 = vpack.c.b16 %v106, %v105
    %v119 = vpack.c.b16 %v108, %v107
    %v120 = vpack.c.b16 %v110, %v109
    %v121 = vpack.c.b16 %v112, %v111
    %v122 = vpack.c.b16 %v114, %v113
    %131 = vmatprep.subr.bf16.mxu0 0
    %132 = vmatpush1.bf16.msra.mxu0 %v122
    %133 = vmatprep.subr.bf16.mxu0 0
    %134 = vmatpush1.bf16.msra.mxu0 %v121
    %135 = vmatprep.subr.bf16.mxu0 0
    %136 = vmatpush1.bf16.msra.mxu0 %v120
    %137 = vmatprep.subr.bf16.mxu0 0
    %138 = vmatpush1.bf16.msra.mxu0 %v119
    %139 = vmatprep.subr.bf16.mxu0 0
    %140 = vmatpush1.bf16.msra.mxu0 %v118
    %141 = vmatprep.subr.bf16.mxu0 0
    %142 = vmatpush1.bf16.msra.mxu0 %v117
    %143 = vmatprep.subr.bf16.mxu0 0
    %144 = vmatpush1.bf16.msra.mxu0 %v116
    %145 = vmatprep.subr.bf16.mxu0 0
    %146 = vmatpush1.bf16.msra.mxu0 %v115
    %147 = vmatprep.subr.bf16.mxu0 0
    %148 = vmatpush2.bf16.msra.mxu0 0
    %149 = vmatprep.subr.bf16.mxu0 0
    %150 = vmatpush2.bf16.msra.mxu0 0
    %151 = vmatprep.subr.bf16.mxu0 0
    %152 = vmatpush2.bf16.msra.mxu0 0
    %153 = vmatprep.subr.bf16.mxu0 0
    %154 = vmatpush2.bf16.msra.mxu0 0
    %155 = vmatprep.subr.bf16.mxu0 0
    %156 = vmatpush2.bf16.msra.mxu0 0
    %157 = vmatprep.subr.bf16.mxu0 0
    %158 = vmatpush2.bf16.msra.mxu0 0
    %159 = vmatprep.subr.bf16.mxu0 0
    %160 = vmatpush2.bf16.msra.mxu0 0
    %161 = vmatprep.subr.bf16.mxu0 0
    %162 = vmatpush2.bf16.msra.mxu0 0
    %163 = vmatprep.mubr.bf16.mxu0 0
    %164 = vmatmul.mubr.bf16.gmra.mxu0 %v79
    %v165 = vpop.f32.mrf.mxu0
    %v166 = vadd.f32 %v69, %v165
    %v167 = vpop.f32.mrf.mxu0
    %v168 = vpop.f32.mrf.mxu0
    %v169 = vadd.f32 %v69, %v168
    %v170 = vpop.f32.mrf.mxu0
    %171 = vmatprep.mubr.bf16.mxu0 0
    %172 = vmatmul.mubr.bf16.gmra.mxu0 %v80
    %v173 = vpop.f32.mrf.mxu0
    %v174 = vadd.f32 %v69, %v173
    %v175 = vpop.f32.mrf.mxu0
    %v176 = vpop.f32.mrf.mxu0
    %v177 = vadd.f32 %v69, %v176
    %v178 = vpop.f32.mrf.mxu0
    %179 = vdwg.mxu0
    %180 = vst [vmem:[#allocation7] sm:$0xff] %v166
    %181 = vst [vmem:[#allocation7 + $0x8] sm:$0xff] %v169
    %182 = vst [vmem:[#allocation7 + $0x10] sm:$0xff] %v174
    %183 = vst [vmem:[#allocation7 + $0x18] sm:$0xff] %v177
    // Predicated region
    $region22: #{tpu_custom_call.1} parent=1 // pred_check
      _
    $region23: #{tpu_custom_call.1} parent=1 // pred_check_branch
      %185 = sbr.rel (0) target = $region25
    $region24: #{tpu_custom_call.1} parent=1 // pred_region
      %s187 = ssub.s32 512, 512
      %188 = vsyncadd [#allocation4], %s187
      %s189 = sshll.u32 [#allocation7], 4
      %s190 = int_to_ptr.vmem [resolvable:$true] %s189
      %195 = dma.vmem_to_hbm [thread:$0]  %s190, 512, %s3, [#allocation4], 128, 128, 8
    $region25: #{tpu_custom_call.1} parent=1 // pred_fallthru
      _
    // Predicated region
    $region26: #{tpu_custom_call.1} parent=1 // pred_check
      _
    $region27: #{tpu_custom_call.1} parent=1 // pred_check_branch
      %197 = sbr.rel (0) target = $region29
    $region28: #{tpu_custom_call.1} parent=1 // pred_region
      %198 = dma.done [#allocation4], 512
    $region29: #{tpu_custom_call.1} parent=1 // pred_fallthru
      _
    %199 = vsyncpa [#allocation3], 1
    %200 = vsyncpa [#allocation6], 1
    %201 = vsyncpa [#allocation4], 1

</llo_original>
